<compile_context>
chip_gen: v7x
topology: tpu7x:2x2x1
jax: 0.10.0
libtpu: 0.0.40
codegen_flags: <defaults>
</compile_context>

<pallas_src>
import functools

import jax
import jax.numpy as jnp
from jax.experimental import pallas as pl
from jax.experimental.pallas import tpu as pltpu

LANE = 128                      # vreg lane width
SUBLANE_BF16 = 16               # bf16 packs 2 rows per sublane
VMEM_BUDGET = 48 * 1024 * 1024  # buffer budget targeting the smallest gen (v7x)


def _round_up(n, m):
    return ((n + m - 1) // m) * m


def _mlp_kernel(x_ref, w1_ref, b1_ref, w2_ref, b2_ref, o_ref):
    # Cast x to the MXU dtype in-kernel (no-op if the wrapper already did it).
    x = x_ref[...].astype(w1_ref.dtype)
    # fc1: MXU matmul with f32 accumulation; bias + ReLU on the VPU in f32.
    h = jnp.dot(x, w1_ref[...], preferred_element_type=jnp.float32)
    h = jnp.maximum(h + b1_ref[...], 0.0)
    # fc2: cast activations back to the MXU dtype, accumulate in f32.
    out = jnp.dot(h.astype(w2_ref.dtype), w2_ref[...],
                  preferred_element_type=jnp.float32)
    o_ref[...] = (out + b2_ref[...]).astype(o_ref.dtype)


def prepare_params(w1, b1, w2, b2, *, use_bf16=True):
    """One-time pad (to 128 lanes) + cast of weights/biases.

    Hoisted out of the per-call path so repeated forwards don't re-read and
    re-write every weight in HBM each step. Weights are stored [in, out] so the
    forward is x @ W (same math as torch's x @ W.T).
    Zero padding is exact: padded x columns hit zero w1 rows, padded hidden
    units get zero weights + zero bias (ReLU(0)=0), padded classes are sliced.
    """
    D_in, H = w1.shape
    C = w2.shape[1]
    Dp, Hp, Cp = _round_up(D_in, LANE), _round_up(H, LANE), _round_up(C, LANE)
    w_dtype = jnp.bfloat16 if use_bf16 else w1.dtype
    # TODO(synk): on v7x an fp8 weight path would halve weight DMA/VMEM further.
    w1_p = jnp.zeros((Dp, Hp), w_dtype).at[:D_in, :H].set(w1.astype(w_dtype))
    w2_p = jnp.zeros((Hp, Cp), w_dtype).at[:H, :C].set(w2.astype(w_dtype))
    b1_p = jnp.zeros((1, Hp), jnp.float32).at[0, :H].set(b1.astype(jnp.float32))
    b2_p = jnp.zeros((1, Cp), jnp.float32).at[0, :C].set(b2.astype(jnp.float32))
    return (w1_p, b1_p, w2_p, b2_p), (D_in, H, C)


@functools.partial(
    jax.jit,
    static_argnames=("num_classes", "block_b", "single_buffer_weights"))
def neural_net_forward(x, w1_p, b1_p, w2_p, b2_p, *, num_classes,
                       block_b=512, single_buffer_weights=True):
    """y = relu(x @ w1 + b1) @ w2 + b2, using prepare_params() outputs."""
    B, D_in = x.shape
    Dp, Hp = w1_p.shape
    Cp = w2_p.shape[1]
    C = num_classes
    assert Dp == _round_up(D_in, LANE) and Cp >= C
    mxu_dtype = w1_p.dtype

    # Only materialize a padded copy of x when its feature dim isn't
    # lane-aligned (the copy also performs the bf16 cast in the same pass).
    # Otherwise stream x as-is and cast inside the kernel: no extra HBM pass.
    if D_in != Dp:
        x_in = jnp.zeros((B, Dp), mxu_dtype).at[:, :D_in].set(x.astype(mxu_dtype))
    else:
        x_in = x

    # --- Batch tiling --------------------------------------------------------
    row_align = SUBLANE_BF16 if x_in.dtype == jnp.bfloat16 else 8
    # >=2 tiles when the batch is big enough so "parallel" shards across both
    # TensorCores on v7x; no HBM batch padding (Pallas masks the partial tile).
    num_tiles = max(2, pl.cdiv(B, block_b)) if B >= 32 else 1
    TB = pl.cdiv(B, num_tiles)
    TB = _round_up(TB, row_align) if B >= row_align else B

    # --- VMEM budget (target v7x: 64 MiB/TC physical) ------------------------
    w_itemsize = jnp.dtype(mxu_dtype).itemsize
    x_itemsize = jnp.dtype(x_in.dtype).itemsize
    o_itemsize = jnp.dtype(x.dtype).itemsize
    w_bufs = 1 if single_buffer_weights else 2
    weight_vmem = ((Dp * Hp + Hp * Cp) * w_itemsize
                   + 8 * (Hp + Cp) * 4) * w_bufs  # biases are sublane-padded

    def tile_vmem(tb):
        return (2 * tb * Dp * x_itemsize       # x double buffer
                + 2 * tb * Cp * o_itemsize     # out double buffer
                + tb * Hp * 4 + tb * Cp * 4)   # f32 intermediates

    while TB > row_align and weight_vmem + tile_vmem(TB) > VMEM_BUDGET:
        TB = _round_up(TB // 2, row_align)
    # TODO(synk): if resident weights alone ever exceed the budget (very large
    # hidden sizes), add a grid axis over Hp with an f32 VMEM accumulator
    # (pl.when init/finalize) instead of keeping all weights resident.

    grid = (pl.cdiv(B, TB),)
    vmem_limit = int(min(max((weight_vmem + tile_vmem(TB)) * 5 // 4 + (4 << 20),
                             32 << 20), 64 << 20))

    rows = grid[0] * TB
    cost = pl.CostEstimate(
        flops=2 * rows * Dp * Hp + 2 * rows * Hp * Cp,
        transcendentals=0,
        bytes_accessed=(rows * Dp * x_itemsize
                        + (Dp * Hp + Hp * Cp) * w_itemsize
                        + rows * Cp * o_itemsize))

    if single_buffer_weights:
        def resident(shape):
            return pl.BlockSpec(shape, lambda i: (0, 0),
                                pipeline_mode=pl.Buffered(1))
    else:
        def resident(shape):
            return pl.BlockSpec(shape, lambda i: (0, 0))

    out = pl.pallas_call(
        _mlp_kernel,
        out_shape=jax.ShapeDtypeStruct((B, Cp), x.dtype),
        grid=grid,
        in_specs=[
            pl.BlockSpec((TB, Dp), lambda i: (i, 0)),  # x: streamed per tile
            resident((Dp, Hp)),                        # w1: resident in VMEM
            resident((1, Hp)),                         # b1: resident
            resident((Hp, Cp)),                        # w2: resident
            resident((1, Cp)),                         # b2: resident
        ],
        out_specs=pl.BlockSpec((TB, Cp), lambda i: (i, 0)),
        compiler_params=pltpu.CompilerParams(
            dimension_semantics=("parallel",),
            vmem_limit_bytes=vmem_limit),
        cost_estimate=cost,
    )(x_in, w1_p, b1_p, w2_p, b2_p)

    # Slice only the dim that was actually padded (classes); the batch dim is
    # exact, so no extra HBM pass over the batch.
    return out[:, :C] if Cp != C else out


def init_linear_params(key, in_features, out_features, dtype=jnp.float32):
    """torch.nn.Linear default init: U(-1/sqrt(fan_in), 1/sqrt(fan_in))."""
    kw, kb = jax.random.split(key)
    bound = 1.0 / jnp.sqrt(jnp.asarray(in_features, dtype))
    w = jax.random.uniform(kw, (in_features, out_features), dtype,
                           minval=-bound, maxval=bound)
    b = jax.random.uniform(kb, (out_features,), dtype,
                           minval=-bound, maxval=bound)
    return w, b


if __name__ == "__main__":
    # Small shapes consistent with NeuralNet(input_size, hidden_size, num_classes)
    batch = 8
    input_size = 32
    hidden_size = 64
    num_classes = 16

    key = jax.random.PRNGKey(0)
    kx, k1, k2 = jax.random.split(key, 3)

    x = jax.random.normal(kx, (batch, input_size), jnp.float32)
    w1, b1 = init_linear_params(k1, input_size, hidden_size)
    w2, b2 = init_linear_params(k2, hidden_size, num_classes)

    # One-time weight pad/cast, reused across forward calls.
    params, (_, _, C) = prepare_params(w1, b1, w2, b2, use_bf16=True)
    params = jax.block_until_ready(params)

    try:
        out = jax.block_until_ready(
            neural_net_forward(x, *params, num_classes=C))
    except Exception:
        # Fallback for Pallas builds that reject single-buffered block specs.
        out = jax.block_until_ready(
            neural_net_forward(x, *params, num_classes=C,
                               single_buffer_weights=False))

    assert out.shape == (batch, num_classes)
    assert out.dtype == x.dtype

    # Tight check vs. a reference with the same bf16 MXU / f32 accumulation.
    bf = jnp.bfloat16
    h_ref = jnp.maximum(
        jnp.dot(x.astype(bf), w1.astype(bf),
                preferred_element_type=jnp.float32) + b1, 0.0)
    ref_bf16 = jnp.dot(h_ref.astype(bf), w2.astype(bf),
                       preferred_element_type=jnp.float32) + b2
    assert jnp.allclose(out, ref_bf16, atol=2e-3, rtol=2e-3)

    # Loose check against the full-f32 PyTorch-equivalent forward.
    ref_f32 = jnp.maximum(x @ w1 + b1, 0.0) @ w2 + b2
    assert jnp.allclose(out, ref_f32, atol=5e-2, rtol=5e-2)

    print("KERNEL_OK")
</pallas_src>

<mosaic_0001>
module attributes {stable_mosaic.version = 11 : i64} {
  func.func @_mlp_kernel(%arg0: i32, %arg1: memref<8x128xbf16, #tpu.memory_space<vmem>>, %arg2: memref<128x128xbf16, #tpu.memory_space<vmem>>, %arg3: memref<1x128xf32, #tpu.memory_space<vmem>>, %arg4: memref<128x128xbf16, #tpu.memory_space<vmem>>, %arg5: memref<1x128xf32, #tpu.memory_space<vmem>>, %arg6: memref<8x128xf32, #tpu.memory_space<vmem>>) attributes {dimension_semantics = [#tpu.dimension_semantics<parallel>], iteration_bounds = array<i64: 1>, scalar_prefetch = 0 : i64, scratch_operands = 0 : i64, tpu.core_type = #tpu.core_type<tc>, window_params = [{transform_indices = @transform_0, window_bounds = array<i64: 8, 128>}, {pipeline_mode = #tpu.pipeline_mode<synchronous>, transform_indices = @transform_1, window_bounds = array<i64: 128, 128>}, {pipeline_mode = #tpu.pipeline_mode<synchronous>, transform_indices = @transform_2, window_bounds = array<i64: 1, 128>}, {pipeline_mode = #tpu.pipeline_mode<synchronous>, transform_indices = @transform_3, window_bounds = array<i64: 128, 128>}, {pipeline_mode = #tpu.pipeline_mode<synchronous>, transform_indices = @transform_4, window_bounds = array<i64: 1, 128>}, {transform_indices = @transform_5, window_bounds = array<i64: 8, 128>}]} {
    %c0 = arith.constant 0 : index
    %c0_0 = arith.constant 0 : index
    %0 = vector.load %arg1[%c0, %c0_0] : memref<8x128xbf16, #tpu.memory_space<vmem>>, vector<8x128xbf16>
    %c0_1 = arith.constant 0 : index
    %c0_2 = arith.constant 0 : index
    %1 = vector.load %arg2[%c0_1, %c0_2] : memref<128x128xbf16, #tpu.memory_space<vmem>>, vector<128x128xbf16>
    %cst = arith.constant dense<0.000000e+00> : vector<8x128xf32>
    %2 = tpu.matmul %0, %1, %cst {dimension_numbers = #tpu.dot_dimension_numbers<[1], [0], [0], [1], [0, 0, 1, 1], [], []>} : vector<8x128xbf16>, vector<128x128xbf16>, vector<8x128xf32> -> vector<8x128xf32>
    %c0_3 = arith.constant 0 : index
    %c0_4 = arith.constant 0 : index
    %3 = vector.load %arg3[%c0_3, %c0_4] : memref<1x128xf32, #tpu.memory_space<vmem>>, vector<1x128xf32>
    %4 = vector.broadcast %3 : vector<1x128xf32> to vector<8x128xf32>
    %5 = arith.addf %2, %4 : vector<8x128xf32>
    %cst_5 = arith.constant 0.000000e+00 : f32
    %6 = vector.broadcast %cst_5 : f32 to vector<8x128xf32>
    %7 = arith.maximumf %5, %6 : vector<8x128xf32>
    %8 = arith.truncf %7 : vector<8x128xf32> to vector<8x128xbf16>
    %c0_6 = arith.constant 0 : index
    %c0_7 = arith.constant 0 : index
    %9 = vector.load %arg4[%c0_6, %c0_7] : memref<128x128xbf16, #tpu.memory_space<vmem>>, vector<128x128xbf16>
    %cst_8 = arith.constant dense<0.000000e+00> : vector<8x128xf32>
    %10 = tpu.matmul %8, %9, %cst_8 {dimension_numbers = #tpu.dot_dimension_numbers<[1], [0], [0], [1], [0, 0, 1, 1], [], []>} : vector<8x128xbf16>, vector<128x128xbf16>, vector<8x128xf32> -> vector<8x128xf32>
    %c0_9 = arith.constant 0 : index
    %c0_10 = arith.constant 0 : index
    %11 = vector.load %arg5[%c0_9, %c0_10] : memref<1x128xf32, #tpu.memory_space<vmem>>, vector<1x128xf32>
    %12 = vector.broadcast %11 : vector<1x128xf32> to vector<8x128xf32>
    %13 = arith.addf %10, %12 : vector<8x128xf32>
    %c0_11 = arith.constant 0 : index
    %c0_12 = arith.constant 0 : index
    %14 = vector.load %arg6[%c0_11, %c0_12] : memref<8x128xf32, #tpu.memory_space<vmem>>, vector<8x128xf32>
    tpu.vector_store %arg6[%c0_11, %c0_12], %13 {strides = array<i32>} : memref<8x128xf32, #tpu.memory_space<vmem>>, vector<8x128xf32>,
    return
  }
  func.func @transform_0(%arg0: i32) -> (i32, i32) {
    %c0_i32 = arith.constant 0 : i32
    %c0_i32_0 = arith.constant 0 : i32
    return %arg0, %c0_i32 : i32, i32
  }
  func.func @transform_1(%arg0: i32) -> (i32, i32) {
    %c0_i32 = arith.constant 0 : i32
    %c0_i32_0 = arith.constant 0 : i32
    %c0_i32_1 = arith.constant 0 : i32
    return %c0_i32, %c0_i32_0 : i32, i32
  }
  func.func @transform_2(%arg0: i32) -> (i32, i32) {
    %c0_i32 = arith.constant 0 : i32
    %c0_i32_0 = arith.constant 0 : i32
    %c0_i32_1 = arith.constant 0 : i32
    return %c0_i32, %c0_i32_0 : i32, i32
  }
  func.func @transform_3(%arg0: i32) -> (i32, i32) {
    %c0_i32 = arith.constant 0 : i32
    %c0_i32_0 = arith.constant 0 : i32
    %c0_i32_1 = arith.constant 0 : i32
    return %c0_i32, %c0_i32_0 : i32, i32
  }
  func.func @transform_4(%arg0: i32) -> (i32, i32) {
    %c0_i32 = arith.constant 0 : i32
    %c0_i32_0 = arith.constant 0 : i32
    %c0_i32_1 = arith.constant 0 : i32
    return %c0_i32, %c0_i32_0 : i32, i32
  }
  func.func @transform_5(%arg0: i32) -> (i32, i32) {
    %c0_i32 = arith.constant 0 : i32
    %c0_i32_0 = arith.constant 0 : i32
    return %arg0, %c0_i32 : i32, i32
  }
}

module attributes {stable_mosaic.version = 11 : i64} {
  func.func @_mlp_kernel(%arg0: i32, %arg1: memref<8x128xbf16, #tpu.memory_space<vmem>>, %arg2: memref<128x128xbf16, #tpu.memory_space<vmem>>, %arg3: memref<1x128xf32, #tpu.memory_space<vmem>>, %arg4: memref<128x128xbf16, #tpu.memory_space<vmem>>, %arg5: memref<1x128xf32, #tpu.memory_space<vmem>>, %arg6: memref<8x128xf32, #tpu.memory_space<vmem>>) attributes {dimension_semantics = [#tpu.dimension_semantics<parallel>], iteration_bounds = array<i64: 1>, scalar_prefetch = 0 : i64, scratch_operands = 0 : i64, tpu.core_type = #tpu.core_type<tc>, window_params = [{transform_indices = @transform_0, window_bounds = array<i64: 8, 128>}, {pipeline_mode = #tpu.pipeline_mode<synchronous>, transform_indices = @transform_1, window_bounds = array<i64: 128, 128>}, {pipeline_mode = #tpu.pipeline_mode<synchronous>, transform_indices = @transform_2, window_bounds = array<i64: 1, 128>}, {pipeline_mode = #tpu.pipeline_mode<synchronous>, transform_indices = @transform_3, window_bounds = array<i64: 128, 128>}, {pipeline_mode = #tpu.pipeline_mode<synchronous>, transform_indices = @transform_4, window_bounds = array<i64: 1, 128>}, {transform_indices = @transform_5, window_bounds = array<i64: 8, 128>}]} {
    %c0 = arith.constant 0 : index
    %c0_0 = arith.constant 0 : index
    %0 = vector.load %arg1[%c0, %c0_0] : memref<8x128xbf16, #tpu.memory_space<vmem>>, vector<8x128xbf16>
    %c0_1 = arith.constant 0 : index
    %c0_2 = arith.constant 0 : index
    %1 = vector.load %arg2[%c0_1, %c0_2] : memref<128x128xbf16, #tpu.memory_space<vmem>>, vector<128x128xbf16>
    %cst = arith.constant dense<0.000000e+00> : vector<8x128xf32>
    %2 = tpu.matmul %0, %1, %cst {dimension_numbers = #tpu.dot_dimension_numbers<[1], [0], [0], [1], [0, 0, 1, 1], [], []>} : vector<8x128xbf16>, vector<128x128xbf16>, vector<8x128xf32> -> vector<8x128xf32>
    %c0_3 = arith.constant 0 : index
    %c0_4 = arith.constant 0 : index
    %3 = vector.load %arg3[%c0_3, %c0_4] : memref<1x128xf32, #tpu.memory_space<vmem>>, vector<1x128xf32>
    %4 = vector.broadcast %3 : vector<1x128xf32> to vector<8x128xf32>
    %5 = arith.addf %2, %4 : vector<8x128xf32>
    %cst_5 = arith.constant 0.000000e+00 : f32
    %6 = vector.broadcast %cst_5 : f32 to vector<8x128xf32>
    %7 = arith.maximumf %5, %6 : vector<8x128xf32>
    %8 = arith.truncf %7 : vector<8x128xf32> to vector<8x128xbf16>
    %c0_6 = arith.constant 0 : index
    %c0_7 = arith.constant 0 : index
    %9 = vector.load %arg4[%c0_6, %c0_7] : memref<128x128xbf16, #tpu.memory_space<vmem>>, vector<128x128xbf16>
    %cst_8 = arith.constant dense<0.000000e+00> : vector<8x128xf32>
    %10 = tpu.matmul %8, %9, %cst_8 {dimension_numbers = #tpu.dot_dimension_numbers<[1], [0], [0], [1], [0, 0, 1, 1], [], []>} : vector<8x128xbf16>, vector<128x128xbf16>, vector<8x128xf32> -> vector<8x128xf32>
    %c0_9 = arith.constant 0 : index
    %c0_10 = arith.constant 0 : index
    %11 = vector.load %arg5[%c0_9, %c0_10] : memref<1x128xf32, #tpu.memory_space<vmem>>, vector<1x128xf32>
    %12 = vector.broadcast %11 : vector<1x128xf32> to vector<8x128xf32>
    %13 = arith.addf %10, %12 : vector<8x128xf32>
    %c0_11 = arith.constant 0 : index
    %c0_12 = arith.constant 0 : index
    %14 = vector.load %arg6[%c0_11, %c0_12] : memref<8x128xf32, #tpu.memory_space<vmem>>, vector<8x128xf32>
    tpu.vector_store %arg6[%c0_11, %c0_12], %13 {strides = array<i32>} : memref<8x128xf32, #tpu.memory_space<vmem>>, vector<8x128xf32>,
    return
  }
  func.func @transform_0(%arg0: i32) -> (i32, i32) {
    %c0_i32 = arith.constant 0 : i32
    %c0_i32_0 = arith.constant 0 : i32
    return %arg0, %c0_i32 : i32, i32
  }
  func.func @transform_1(%arg0: i32) -> (i32, i32) {
    %c0_i32 = arith.constant 0 : i32
    %c0_i32_0 = arith.constant 0 : i32
    %c0_i32_1 = arith.constant 0 : i32
    return %c0_i32, %c0_i32_0 : i32, i32
  }
  func.func @transform_2(%arg0: i32) -> (i32, i32) {
    %c0_i32 = arith.constant 0 : i32
    %c0_i32_0 = arith.constant 0 : i32
    %c0_i32_1 = arith.constant 0 : i32
    return %c0_i32, %c0_i32_0 : i32, i32
  }
  func.func @transform_3(%arg0: i32) -> (i32, i32) {
    %c0_i32 = arith.constant 0 : i32
    %c0_i32_0 = arith.constant 0 : i32
    %c0_i32_1 = arith.constant 0 : i32
    return %c0_i32, %c0_i32_0 : i32, i32
  }
  func.func @transform_4(%arg0: i32) -> (i32, i32) {
    %c0_i32 = arith.constant 0 : i32
    %c0_i32_0 = arith.constant 0 : i32
    %c0_i32_1 = arith.constant 0 : i32
    return %c0_i32, %c0_i32_0 : i32, i32
  }
  func.func @transform_5(%arg0: i32) -> (i32, i32) {
    %c0_i32 = arith.constant 0 : i32
    %c0_i32_0 = arith.constant 0 : i32
    return %arg0, %c0_i32 : i32, i32
  }
}

</mosaic_0001>

<llo_original>
// kernel: neural_net_forward.1
$region0: #{neural_net_forward.1}
  #allocation0 [shape = 'u32[]', space=smem, size = 0x4, offset = 0x4, fixed_abs, tag = 'smem constant byte address 0x4 - core index']
  #allocation1 [shape = 'u32[144,128]{1,0:T(1,128)}', space=vmem, size = 0x12000, scoped, tag = 'internal scratch']
  %s0 = inlined_call_operand.vmem [shape: bf16[8,128], index: 0, kind: input, shape index: {}]
  %s1 = inlined_call_operand.hbm [shape: bf16[128,128], index: 1, kind: input, shape index: {}]
  %s2 = inlined_call_operand.vmem [shape: f32[1,128], index: 2, kind: input, shape index: {}]
  %s3 = inlined_call_operand.hbm [shape: bf16[128,128], index: 3, kind: input, shape index: {}]
  %s4 = inlined_call_operand.vmem [shape: f32[1,128], index: 4, kind: input, shape index: {}]
  %s5 = inlined_call_operand.hbm [shape: f32[8,128], index: 5, kind: output, shape index: {}]
  %s6 = sld [smem:[#allocation0]]
  $region38: #{neural_net_forward.1} parent=0
    _
  %s8 = ssub.s32 1, %s6
  %s9 = scalar_select 0, %s8, %s6
  $region1: #{neural_net_forward.1} parent=0
    #allocation2 [shape = 'u8[32768]{0}', space=vmem, size = 0x8000, scoped, tag = 'input window, operand 1, single buffered']
    #allocation3 [shape = 's32[1]{0}', space=sflag, size = 0x4, scoped, tag = 'scoped memory for neural_net_forward.1']
    #allocation4 [shape = 's32[1]{0}', space=sflag, size = 0x4, scoped, tag = 'scoped memory for neural_net_forward.1']
    #allocation5 [shape = 'u8[32768]{0}', space=vmem, size = 0x8000, scoped, tag = 'input window, operand 3, single buffered']
    #allocation6 [shape = 's32[1]{0}', space=sflag, size = 0x4, scoped, tag = 'scoped memory for neural_net_forward.1']
    #allocation7 [shape = 'u8[4096]{0}', space=vmem, size = 0x1000, scoped, tag = 'output window, operand 0, single buffered']
    %10 = vsyncpa [#allocation3], 0
    %11 = vsyncpa [#allocation6], 0
    %12 = vsyncpa [#allocation4], 0
    // Predicated region
    $region2: #{neural_net_forward.1} parent=1 // pred_check
      _
    $region3: #{neural_net_forward.1} parent=1 // pred_check_branch
      %14 = sbr.rel (0) target = $region5
    $region4: #{neural_net_forward.1} parent=1 // pred_region
      _
    $region5: #{neural_net_forward.1} parent=1 // pred_fallthru
      _
    // Predicated region
    $region6: #{neural_net_forward.1} parent=1 // pred_check
      _
    $region7: #{neural_net_forward.1} parent=1 // pred_check_branch
      %16 = sbr.rel (0) target = $region9
    $region8: #{neural_net_forward.1} parent=1 // pred_region
      %s18 = ssub.s32 1024, 1024
      %19 = vsyncadd [#allocation3], %s18
      %s20 = sshll.u32 [#allocation2], 4
      %s21 = int_to_ptr.vmem [resolvable:$true] %s20
      %26 = dma.hbm_to_vmem [thread:$0]  %s1, 1024, %s21, [#allocation3], 64, 64, 4
    $region9: #{neural_net_forward.1} parent=1 // pred_fallthru
      _
    // Predicated region
    $region10: #{neural_net_forward.1} parent=1 // pred_check
      _
    $region11: #{neural_net_forward.1} parent=1 // pred_check_branch
      %28 = sbr.rel (0) target = $region13
    $region12: #{neural_net_forward.1} parent=1 // pred_region
      _
    $region13: #{neural_net_forward.1} parent=1 // pred_fallthru
      _
    // Predicated region
    $region14: #{neural_net_forward.1} parent=1 // pred_check
      _
    $region15: #{neural_net_forward.1} parent=1 // pred_check_branch
      %30 = sbr.rel (0) target = $region17
    $region16: #{neural_net_forward.1} parent=1 // pred_region
      %s32 = ssub.s32 1024, 1024
      %33 = vsyncadd [#allocation6], %s32
      %s34 = sshll.u32 [#allocation5], 4
      %s35 = int_to_ptr.vmem [resolvable:$true] %s34
      %40 = dma.hbm_to_vmem [thread:$0]  %s3, 1024, %s35, [#allocation6], 64, 64, 4
    $region17: #{neural_net_forward.1} parent=1 // pred_fallthru
      _
    // Predicated region
    $region18: #{neural_net_forward.1} parent=1 // pred_check
      _
    $region19: #{neural_net_forward.1} parent=1 // pred_check_branch
      %42 = sbr.rel (0) target = $region21
    $region20: #{neural_net_forward.1} parent=1 // pred_region
      _
    $region21: #{neural_net_forward.1} parent=1 // pred_fallthru
      _
    // Predicated region
    $region22: #{neural_net_forward.1} parent=1 // pred_check
      _
    $region23: #{neural_net_forward.1} parent=1 // pred_check_branch
      %44 = sbr.rel (0) target = $region25
    $region24: #{neural_net_forward.1} parent=1 // pred_region
      %45 = dma.done [#allocation3], 1024
    $region25: #{neural_net_forward.1} parent=1 // pred_fallthru
      _
    // Predicated region
    $region26: #{neural_net_forward.1} parent=1 // pred_check
      _
    $region27: #{neural_net_forward.1} parent=1 // pred_check_branch
      %47 = sbr.rel (0) target = $region29
    $region28: #{neural_net_forward.1} parent=1 // pred_region
      %48 = dma.done [#allocation6], 1024
    $region29: #{neural_net_forward.1} parent=1 // pred_fallthru
      _
    %v50 = vld [vmem:[%s0] sm:$0xf]
    %v51 = vld [vmem:[#allocation2] sm:$0xf]
    %v52 = vld [vmem:[#allocation2 + $0x4] sm:$0xf]
    %v53 = vld [vmem:[#allocation2 + $0x8] sm:$0xf]
    %v54 = vld [vmem:[#allocation2 + $0xc] sm:$0xf]
    %v55 = vld [vmem:[#allocation2 + $0x10] sm:$0xf]
    %v56 = vld [vmem:[#allocation2 + $0x14] sm:$0xf]
    %v57 = vld [vmem:[#allocation2 + $0x18] sm:$0xf]
    %v58 = vld [vmem:[#allocation2 + $0x1c] sm:$0xf]
    %v59 = vld [vmem:[#allocation2 + $0x20] sm:$0xf]
    %v60 = vld [vmem:[#allocation2 + $0x24] sm:$0xf]
    %v61 = vld [vmem:[#allocation2 + $0x28] sm:$0xf]
    %v62 = vld [vmem:[#allocation2 + $0x2c] sm:$0xf]
    %v63 = vld [vmem:[#allocation2 + $0x30] sm:$0xf]
    %v64 = vld [vmem:[#allocation2 + $0x34] sm:$0xf]
    %v65 = vld [vmem:[#allocation2 + $0x38] sm:$0xf]
    %v66 = vld [vmem:[#allocation2 + $0x3c] sm:$0xf]
    %v67 = vld [vmem:[%s2] sm:$0x1]
    %v69 = vlaneseq
    %v70 = vshrl.u32 %v69, 7
    %v71 = vsub.s32 0, %v70
    %v72 = vrot.slane %v67, %v71
    %v90 = vunpack.c.l.b16 %v51
    %v91 = vunpack.c.l.b16 %v52
    %v92 = vunpack.c.l.b16 %v53
    %v93 = vunpack.c.l.b16 %v54
    %v94 = vunpack.c.l.b16 %v55
    %v95 = vunpack.c.l.b16 %v56
    %v96 = vunpack.c.l.b16 %v57
    %v97 = vunpack.c.l.b16 %v58
    %v98 = vunpack.c.l.b16 %v59
    %v99 = vunpack.c.l.b16 %v60
    %v100 = vunpack.c.l.b16 %v61
    %v101 = vunpack.c.l.b16 %v62
    %v102 = vunpack.c.l.b16 %v63
    %v103 = vunpack.c.l.b16 %v64
    %v104 = vunpack.c.l.b16 %v65
    %v105 = vunpack.c.l.b16 %v66
    %v106 = vpack.c.b16 %v91, %v90
    %v107 = vpack.c.b16 %v93, %v92
    %v108 = vpack.c.b16 %v95, %v94
    %v109 = vpack.c.b16 %v97, %v96
    %v110 = vpack.c.b16 %v99, %v98
    %v111 = vpack.c.b16 %v101, %v100
    %v112 = vpack.c.b16 %v103, %v102
    %v113 = vpack.c.b16 %v105, %v104
    %122 = vmatprep.subr.bf16.mxu0 0
    %123 = vmatpush1.bf16.msra.mxu0 %v106
    %124 = vmatprep.subr.bf16.mxu0 0
    %125 = vmatpush1.bf16.msra.mxu0 %v107
    %126 = vmatprep.subr.bf16.mxu0 0
    %127 = vmatpush1.bf16.msra.mxu0 %v108
    %128 = vmatprep.subr.bf16.mxu0 0
    %129 = vmatpush1.bf16.msra.mxu0 %v109
    %130 = vmatprep.subr.bf16.mxu0 0
    %131 = vmatpush1.bf16.msra.mxu0 %v110
    %132 = vmatprep.subr.bf16.mxu0 0
    %133 = vmatpush1.bf16.msra.mxu0 %v111
    %134 = vmatprep.subr.bf16.mxu0 0
    %135 = vmatpush1.bf16.msra.mxu0 %v112
    %136 = vmatprep.subr.bf16.mxu0 0
    %137 = vmatpush1.bf16.msra.mxu0 %v113
    %138 = vmatprep.subr.bf16.mxu0 0
    %139 = vmatpush1.bf16.msra.mxu0 0
    %140 = vmatprep.subr.bf16.mxu0 0
    %141 = vmatpush1.bf16.msra.mxu0 0
    %142 = vmatprep.subr.bf16.mxu0 0
    %143 = vmatpush1.bf16.msra.mxu0 0
    %144 = vmatprep.subr.bf16.mxu0 0
    %145 = vmatpush1.bf16.msra.mxu0 0
    %146 = vmatprep.subr.bf16.mxu0 0
    %147 = vmatpush1.bf16.msra.mxu0 0
    %148 = vmatprep.subr.bf16.mxu0 0
    %149 = vmatpush1.bf16.msra.mxu0 0
    %150 = vmatprep.subr.bf16.mxu0 0
    %151 = vmatpush1.bf16.msra.mxu0 0
    %152 = vmatprep.subr.bf16.mxu0 0
    %153 = vmatpush1.bf16.msra.mxu0 0
    %154 = vmatprep.mubr.bf16.mxu0 0
    %155 = vmatmul.mubr.bf16.gmra.mrb[0].mxu0 %v50
    %v156 = vpop.f32.mrb[0].mxu0
    %v157 = vadd.f32 %v72, %v156
    %v158 = vpop.f32.mrb[0].mxu0
    %v159 = vpop.f32.mrb[0].mxu0
    %v160 = vpop.f32.mrb[0].mxu0
    %161 = vdwg.mxu0
    %v162 = vmax.f32 %v157, 0.0
    %v163 = vpack.c.bf16 %v162, %v162
    %v164 = vld [vmem:[#allocation5] sm:$0xf]
    %v165 = vld [vmem:[#allocation5 + $0x4] sm:$0xf]
    %v166 = vld [vmem:[#allocation5 + $0x8] sm:$0xf]
    %v167 = vld [vmem:[#allocation5 + $0xc] sm:$0xf]
    %v168 = vld [vmem:[#allocation5 + $0x10] sm:$0xf]
    %v169 = vld [vmem:[#allocation5 + $0x14] sm:$0xf]
    %v170 = vld [vmem:[#allocation5 + $0x18] sm:$0xf]
    %v171 = vld [vmem:[#allocation5 + $0x1c] sm:$0xf]
    %v172 = vld [vmem:[#allocation5 + $0x20] sm:$0xf]
    %v173 = vld [vmem:[#allocation5 + $0x24] sm:$0xf]
    %v174 = vld [vmem:[#allocation5 + $0x28] sm:$0xf]
    %v175 = vld [vmem:[#allocation5 + $0x2c] sm:$0xf]
    %v176 = vld [vmem:[#allocation5 + $0x30] sm:$0xf]
    %v177 = vld [vmem:[#allocation5 + $0x34] sm:$0xf]
    %v178 = vld [vmem:[#allocation5 + $0x38] sm:$0xf]
    %v179 = vld [vmem:[#allocation5 + $0x3c] sm:$0xf]
    %v180 = vld [vmem:[%s4] sm:$0x1]
    %v182 = vlaneseq
    %v183 = vshrl.u32 %v182, 7
    %v184 = vsub.s32 0, %v183
    %v185 = vrot.slane %v180, %v184
    %v203 = vunpack.c.l.b16 %v164
    %v204 = vunpack.c.l.b16 %v165
    %v205 = vunpack.c.l.b16 %v166
    %v206 = vunpack.c.l.b16 %v167
    %v207 = vunpack.c.l.b16 %v168
    %v208 = vunpack.c.l.b16 %v169
    %v209 = vunpack.c.l.b16 %v170
    %v210 = vunpack.c.l.b16 %v171
    %v211 = vunpack.c.l.b16 %v172
    %v212 = vunpack.c.l.b16 %v173
    %v213 = vunpack.c.l.b16 %v174
    %v214 = vunpack.c.l.b16 %v175
    %v215 = vunpack.c.l.b16 %v176
    %v216 = vunpack.c.l.b16 %v177
    %v217 = vunpack.c.l.b16 %v178
    %v218 = vunpack.c.l.b16 %v179
    %v219 = vpack.c.b16 %v204, %v203
    %v220 = vpack.c.b16 %v206, %v205
    %v221 = vpack.c.b16 %v208, %v207
    %v222 = vpack.c.b16 %v210, %v209
    %v223 = vpack.c.b16 %v212, %v211
    %v224 = vpack.c.b16 %v214, %v213
    %v225 = vpack.c.b16 %v216, %v215
    %v226 = vpack.c.b16 %v218, %v217
    %235 = vmatprep.subr.bf16.mxu0 0
    %236 = vmatpush1.bf16.msra.mxu0 %v219
    %237 = vmatprep.subr.bf16.mxu0 0
    %238 = vmatpush1.bf16.msra.mxu0 %v220
    %239 = vmatprep.subr.bf16.mxu0 0
    %240 = vmatpush1.bf16.msra.mxu0 %v221
    %241 = vmatprep.subr.bf16.mxu0 0
    %242 = vmatpush1.bf16.msra.mxu0 %v222
    %243 = vmatprep.subr.bf16.mxu0 0
    %244 = vmatpush1.bf16.msra.mxu0 %v223
    %245 = vmatprep.subr.bf16.mxu0 0
    %246 = vmatpush1.bf16.msra.mxu0 %v224
    %247 = vmatprep.subr.bf16.mxu0 0
    %248 = vmatpush1.bf16.msra.mxu0 %v225
    %249 = vmatprep.subr.bf16.mxu0 0
    %250 = vmatpush1.bf16.msra.mxu0 %v226
    %251 = vmatprep.subr.bf16.mxu0 0
    %252 = vmatpush1.bf16.msra.mxu0 0
    %253 = vmatprep.subr.bf16.mxu0 0
    %254 = vmatpush1.bf16.msra.mxu0 0
    %255 = vmatprep.subr.bf16.mxu0 0
    %256 = vmatpush1.bf16.msra.mxu0 0
    %257 = vmatprep.subr.bf16.mxu0 0
    %258 = vmatpush1.bf16.msra.mxu0 0
    %259 = vmatprep.subr.bf16.mxu0 0
    %260 = vmatpush1.bf16.msra.mxu0 0
    %261 = vmatprep.subr.bf16.mxu0 0
    %262 = vmatpush1.bf16.msra.mxu0 0
    %263 = vmatprep.subr.bf16.mxu0 0
    %264 = vmatpush1.bf16.msra.mxu0 0
    %265 = vmatprep.subr.bf16.mxu0 0
    %266 = vmatpush1.bf16.msra.mxu0 0
    %267 = vmatprep.mubr.bf16.mxu0 0
    %268 = vmatmul.mubr.bf16.gmra.mrb[0].mxu0 %v163
    %v269 = vpop.f32.mrb[0].mxu0
    %v270 = vadd.f32 %v185, %v269
    %v271 = vpop.f32.mrb[0].mxu0
    %v272 = vpop.f32.mrb[0].mxu0
    %v273 = vpop.f32.mrb[0].mxu0
    %274 = vdwg.mxu0
    %275 = vst [vmem:[#allocation7] sm:$0xff] %v270
    // Predicated region
    $region30: #{neural_net_forward.1} parent=1 // pred_check
      _
    $region31: #{neural_net_forward.1} parent=1 // pred_check_branch
      %277 = sbr.rel (0) target = $region33
    $region32: #{neural_net_forward.1} parent=1 // pred_region
      %s279 = ssub.s32 128, 128
      %280 = vsyncadd [#allocation4], %s279
      %s282 = sshll.u32 [#allocation7], 4
      %s283 = int_to_ptr.vmem [resolvable:$true] %s282
      %285 = dma.vmem_to_hbm [thread:$0]  %s283, 128, %s5, [#allocation4]
    $region33: #{neural_net_forward.1} parent=1 // pred_fallthru
      _
    // Predicated region
    $region34: #{neural_net_forward.1} parent=1 // pred_check
      _
    $region35: #{neural_net_forward.1} parent=1 // pred_check_branch
      %287 = sbr.rel (0) target = $region37
    $region36: #{neural_net_forward.1} parent=1 // pred_region
      %288 = dma.done [#allocation4], 128
    $region37: #{neural_net_forward.1} parent=1 // pred_fallthru
      _
    %289 = vsyncpa [#allocation3], 1
    %290 = vsyncpa [#allocation6], 1
    %291 = vsyncpa [#allocation4], 1

// kernel: neural_net_forward.1
$region0: #{neural_net_forward.1}
  #allocation0 [shape = 'u32[]', space=smem, size = 0x4, offset = 0x4, fixed_abs, tag = 'smem constant byte address 0x4 - core index']
  #allocation1 [shape = 'u32[144,128]{1,0:T(1,128)}', space=vmem, size = 0x12000, scoped, tag = 'internal scratch']
  %s0 = inlined_call_operand.vmem [shape: bf16[8,128], index: 0, kind: input, shape index: {}]
  %s1 = inlined_call_operand.hbm [shape: bf16[128,128], index: 1, kind: input, shape index: {}]
  %s2 = inlined_call_operand.vmem [shape: f32[1,128], index: 2, kind: input, shape index: {}]
  %s3 = inlined_call_operand.hbm [shape: bf16[128,128], index: 3, kind: input, shape index: {}]
  %s4 = inlined_call_operand.vmem [shape: f32[1,128], index: 4, kind: input, shape index: {}]
  %s5 = inlined_call_operand.hbm [shape: f32[8,128], index: 5, kind: output, shape index: {}]
  %s6 = sld [smem:[#allocation0]]
  $region38: #{neural_net_forward.1} parent=0
    _
  %s8 = ssub.s32 1, %s6
  %s9 = scalar_select 0, %s8, %s6
  $region1: #{neural_net_forward.1} parent=0
    #allocation2 [shape = 'u8[32768]{0}', space=vmem, size = 0x8000, scoped, tag = 'input window, operand 1, single buffered']
    #allocation3 [shape = 's32[1]{0}', space=sflag, size = 0x4, scoped, tag = 'scoped memory for neural_net_forward.1']
    #allocation4 [shape = 's32[1]{0}', space=sflag, size = 0x4, scoped, tag = 'scoped memory for neural_net_forward.1']
    #allocation5 [shape = 'u8[32768]{0}', space=vmem, size = 0x8000, scoped, tag = 'input window, operand 3, single buffered']
    #allocation6 [shape = 's32[1]{0}', space=sflag, size = 0x4, scoped, tag = 'scoped memory for neural_net_forward.1']
    #allocation7 [shape = 'u8[4096]{0}', space=vmem, size = 0x1000, scoped, tag = 'output window, operand 0, single buffered']
    %10 = vsyncpa [#allocation3], 0
    %11 = vsyncpa [#allocation6], 0
    %12 = vsyncpa [#allocation4], 0
    // Predicated region
    $region2: #{neural_net_forward.1} parent=1 // pred_check
      _
    $region3: #{neural_net_forward.1} parent=1 // pred_check_branch
      %14 = sbr.rel (0) target = $region5
    $region4: #{neural_net_forward.1} parent=1 // pred_region
      _
    $region5: #{neural_net_forward.1} parent=1 // pred_fallthru
      _
    // Predicated region
    $region6: #{neural_net_forward.1} parent=1 // pred_check
      _
    $region7: #{neural_net_forward.1} parent=1 // pred_check_branch
      %16 = sbr.rel (0) target = $region9
    $region8: #{neural_net_forward.1} parent=1 // pred_region
      %s18 = ssub.s32 1024, 1024
      %19 = vsyncadd [#allocation3], %s18
      %s20 = sshll.u32 [#allocation2], 4
      %s21 = int_to_ptr.vmem [resolvable:$true] %s20
      %26 = dma.hbm_to_vmem [thread:$0]  %s1, 1024, %s21, [#allocation3], 64, 64, 4
    $region9: #{neural_net_forward.1} parent=1 // pred_fallthru
      _
    // Predicated region
    $region10: #{neural_net_forward.1} parent=1 // pred_check
      _
    $region11: #{neural_net_forward.1} parent=1 // pred_check_branch
      %28 = sbr.rel (0) target = $region13
    $region12: #{neural_net_forward.1} parent=1 // pred_region
      _
    $region13: #{neural_net_forward.1} parent=1 // pred_fallthru
      _
    // Predicated region
    $region14: #{neural_net_forward.1} parent=1 // pred_check
      _
    $region15: #{neural_net_forward.1} parent=1 // pred_check_branch
      %30 = sbr.rel (0) target = $region17
    $region16: #{neural_net_forward.1} parent=1 // pred_region
      %s32 = ssub.s32 1024, 1024
      %33 = vsyncadd [#allocation6], %s32
      %s34 = sshll.u32 [#allocation5], 4
      %s35 = int_to_ptr.vmem [resolvable:$true] %s34
      %40 = dma.hbm_to_vmem [thread:$0]  %s3, 1024, %s35, [#allocation6], 64, 64, 4
    $region17: #{neural_net_forward.1} parent=1 // pred_fallthru
      _
    // Predicated region
    $region18: #{neural_net_forward.1} parent=1 // pred_check
      _
    $region19: #{neural_net_forward.1} parent=1 // pred_check_branch
      %42 = sbr.rel (0) target = $region21
    $region20: #{neural_net_forward.1} parent=1 // pred_region
      _
    $region21: #{neural_net_forward.1} parent=1 // pred_fallthru
      _
    // Predicated region
    $region22: #{neural_net_forward.1} parent=1 // pred_check
      _
    $region23: #{neural_net_forward.1} parent=1 // pred_check_branch
      %44 = sbr.rel (0) target = $region25
    $region24: #{neural_net_forward.1} parent=1 // pred_region
      %45 = dma.done [#allocation3], 1024
    $region25: #{neural_net_forward.1} parent=1 // pred_fallthru
      _
    // Predicated region
    $region26: #{neural_net_forward.1} parent=1 // pred_check
      _
    $region27: #{neural_net_forward.1} parent=1 // pred_check_branch
      %47 = sbr.rel (0) target = $region29
    $region28: #{neural_net_forward.1} parent=1 // pred_region
      %48 = dma.done [#allocation6], 1024
    $region29: #{neural_net_forward.1} parent=1 // pred_fallthru
      _
    %v50 = vld [vmem:[%s0] sm:$0xf]
    %v51 = vld [vmem:[#allocation2] sm:$0xf]
    %v52 = vld [vmem:[#allocation2 + $0x4] sm:$0xf]
    %v53 = vld [vmem:[#allocation2 + $0x8] sm:$0xf]
    %v54 = vld [vmem:[#allocation2 + $0xc] sm:$0xf]
    %v55 = vld [vmem:[#allocation2 + $0x10] sm:$0xf]
    %v56 = vld [vmem:[#allocation2 + $0x14] sm:$0xf]
    %v57 = vld [vmem:[#allocation2 + $0x18] sm:$0xf]
    %v58 = vld [vmem:[#allocation2 + $0x1c] sm:$0xf]
    %v59 = vld [vmem:[#allocation2 + $0x20] sm:$0xf]
    %v60 = vld [vmem:[#allocation2 + $0x24] sm:$0xf]
    %v61 = vld [vmem:[#allocation2 + $0x28] sm:$0xf]
    %v62 = vld [vmem:[#allocation2 + $0x2c] sm:$0xf]
    %v63 = vld [vmem:[#allocation2 + $0x30] sm:$0xf]
    %v64 = vld [vmem:[#allocation2 + $0x34] sm:$0xf]
    %v65 = vld [vmem:[#allocation2 + $0x38] sm:$0xf]
    %v66 = vld [vmem:[#allocation2 + $0x3c] sm:$0xf]
    %v67 = vld [vmem:[%s2] sm:$0x1]
    %v69 = vlaneseq
    %v70 = vshrl.u32 %v69, 7
    %v71 = vsub.s32 0, %v70
    %v72 = vrot.slane %v67, %v71
    %v90 = vunpack.c.l.b16 %v51
    %v91 = vunpack.c.l.b16 %v52
    %v92 = vunpack.c.l.b16 %v53
    %v93 = vunpack.c.l.b16 %v54
    %v94 = vunpack.c.l.b16 %v55
    %v95 = vunpack.c.l.b16 %v56
    %v96 = vunpack.c.l.b16 %v57
    %v97 = vunpack.c.l.b16 %v58
    %v98 = vunpack.c.l.b16 %v59
    %v99 = vunpack.c.l.b16 %v60
    %v100 = vunpack.c.l.b16 %v61
    %v101 = vunpack.c.l.b16 %v62
    %v102 = vunpack.c.l.b16 %v63
    %v103 = vunpack.c.l.b16 %v64
    %v104 = vunpack.c.l.b16 %v65
    %v105 = vunpack.c.l.b16 %v66
    %v106 = vpack.c.b16 %v91, %v90
    %v107 = vpack.c.b16 %v93, %v92
    %v108 = vpack.c.b16 %v95, %v94
    %v109 = vpack.c.b16 %v97, %v96
    %v110 = vpack.c.b16 %v99, %v98
    %v111 = vpack.c.b16 %v101, %v100
    %v112 = vpack.c.b16 %v103, %v102
    %v113 = vpack.c.b16 %v105, %v104
    %122 = vmatprep.subr.bf16.mxu0 0
    %123 = vmatpush1.bf16.msra.mxu0 %v106
    %124 = vmatprep.subr.bf16.mxu0 0
    %125 = vmatpush1.bf16.msra.mxu0 %v107
    %126 = vmatprep.subr.bf16.mxu0 0
    %127 = vmatpush1.bf16.msra.mxu0 %v108
    %128 = vmatprep.subr.bf16.mxu0 0
    %129 = vmatpush1.bf16.msra.mxu0 %v109
    %130 = vmatprep.subr.bf16.mxu0 0
    %131 = vmatpush1.bf16.msra.mxu0 %v110
    %132 = vmatprep.subr.bf16.mxu0 0
    %133 = vmatpush1.bf16.msra.mxu0 %v111
    %134 = vmatprep.subr.bf16.mxu0 0
    %135 = vmatpush1.bf16.msra.mxu0 %v112
    %136 = vmatprep.subr.bf16.mxu0 0
    %137 = vmatpush1.bf16.msra.mxu0 %v113
    %138 = vmatprep.subr.bf16.mxu0 0
    %139 = vmatpush1.bf16.msra.mxu0 0
    %140 = vmatprep.subr.bf16.mxu0 0
    %141 = vmatpush1.bf16.msra.mxu0 0
    %142 = vmatprep.subr.bf16.mxu0 0
    %143 = vmatpush1.bf16.msra.mxu0 0
    %144 = vmatprep.subr.bf16.mxu0 0
    %145 = vmatpush1.bf16.msra.mxu0 0
    %146 = vmatprep.subr.bf16.mxu0 0
    %147 = vmatpush1.bf16.msra.mxu0 0
    %148 = vmatprep.subr.bf16.mxu0 0
    %149 = vmatpush1.bf16.msra.mxu0 0
    %150 = vmatprep.subr.bf16.mxu0 0
    %151 = vmatpush1.bf16.msra.mxu0 0
    %152 = vmatprep.subr.bf16.mxu0 0
    %153 = vmatpush1.bf16.msra.mxu0 0
    %154 = vmatprep.mubr.bf16.mxu0 0
    %155 = vmatmul.mubr.bf16.gmra.mrb[0].mxu0 %v50
    %v156 = vpop.f32.mrb[0].mxu0
    %v157 = vadd.f32 %v72, %v156
    %v158 = vpop.f32.mrb[0].mxu0
    %v159 = vpop.f32.mrb[0].mxu0
    %v160 = vpop.f32.mrb[0].mxu0
    %161 = vdwg.mxu0
    %v162 = vmax.f32 %v157, 0.0
    %v163 = vpack.c.bf16 %v162, %v162
    %v164 = vld [vmem:[#allocation5] sm:$0xf]
    %v165 = vld [vmem:[#allocation5 + $0x4] sm:$0xf]
    %v166 = vld [vmem:[#allocation5 + $0x8] sm:$0xf]
    %v167 = vld [vmem:[#allocation5 + $0xc] sm:$0xf]
    %v168 = vld [vmem:[#allocation5 + $0x10] sm:$0xf]
    %v169 = vld [vmem:[#allocation5 + $0x14] sm:$0xf]
    %v170 = vld [vmem:[#allocation5 + $0x18] sm:$0xf]
    %v171 = vld [vmem:[#allocation5 + $0x1c] sm:$0xf]
    %v172 = vld [vmem:[#allocation5 + $0x20] sm:$0xf]
    %v173 = vld [vmem:[#allocation5 + $0x24] sm:$0xf]
    %v174 = vld [vmem:[#allocation5 + $0x28] sm:$0xf]
    %v175 = vld [vmem:[#allocation5 + $0x2c] sm:$0xf]
    %v176 = vld [vmem:[#allocation5 + $0x30] sm:$0xf]
    %v177 = vld [vmem:[#allocation5 + $0x34] sm:$0xf]
    %v178 = vld [vmem:[#allocation5 + $0x38] sm:$0xf]
    %v179 = vld [vmem:[#allocation5 + $0x3c] sm:$0xf]
    %v180 = vld [vmem:[%s4] sm:$0x1]
    %v182 = vlaneseq
    %v183 = vshrl.u32 %v182, 7
    %v184 = vsub.s32 0, %v183
    %v185 = vrot.slane %v180, %v184
    %v203 = vunpack.c.l.b16 %v164
    %v204 = vunpack.c.l.b16 %v165
    %v205 = vunpack.c.l.b16 %v166
    %v206 = vunpack.c.l.b16 %v167
    %v207 = vunpack.c.l.b16 %v168
    %v208 = vunpack.c.l.b16 %v169
    %v209 = vunpack.c.l.b16 %v170
    %v210 = vunpack.c.l.b16 %v171
    %v211 = vunpack.c.l.b16 %v172
    %v212 = vunpack.c.l.b16 %v173
    %v213 = vunpack.c.l.b16 %v174
    %v214 = vunpack.c.l.b16 %v175
    %v215 = vunpack.c.l.b16 %v176
    %v216 = vunpack.c.l.b16 %v177
    %v217 = vunpack.c.l.b16 %v178
    %v218 = vunpack.c.l.b16 %v179
    %v219 = vpack.c.b16 %v204, %v203
    %v220 = vpack.c.b16 %v206, %v205
    %v221 = vpack.c.b16 %v208, %v207
    %v222 = vpack.c.b16 %v210, %v209
    %v223 = vpack.c.b16 %v212, %v211
    %v224 = vpack.c.b16 %v214, %v213
    %v225 = vpack.c.b16 %v216, %v215
    %v226 = vpack.c.b16 %v218, %v217
    %235 = vmatprep.subr.bf16.mxu0 0
    %236 = vmatpush1.bf16.msra.mxu0 %v219
    %237 = vmatprep.subr.bf16.mxu0 0
    %238 = vmatpush1.bf16.msra.mxu0 %v220
    %239 = vmatprep.subr.bf16.mxu0 0
    %240 = vmatpush1.bf16.msra.mxu0 %v221
    %241 = vmatprep.subr.bf16.mxu0 0
    %242 = vmatpush1.bf16.msra.mxu0 %v222
    %243 = vmatprep.subr.bf16.mxu0 0
    %244 = vmatpush1.bf16.msra.mxu0 %v223
    %245 = vmatprep.subr.bf16.mxu0 0
    %246 = vmatpush1.bf16.msra.mxu0 %v224
    %247 = vmatprep.subr.bf16.mxu0 0
    %248 = vmatpush1.bf16.msra.mxu0 %v225
    %249 = vmatprep.subr.bf16.mxu0 0
    %250 = vmatpush1.bf16.msra.mxu0 %v226
    %251 = vmatprep.subr.bf16.mxu0 0
    %252 = vmatpush1.bf16.msra.mxu0 0
    %253 = vmatprep.subr.bf16.mxu0 0
    %254 = vmatpush1.bf16.msra.mxu0 0
    %255 = vmatprep.subr.bf16.mxu0 0
    %256 = vmatpush1.bf16.msra.mxu0 0
    %257 = vmatprep.subr.bf16.mxu0 0
    %258 = vmatpush1.bf16.msra.mxu0 0
    %259 = vmatprep.subr.bf16.mxu0 0
    %260 = vmatpush1.bf16.msra.mxu0 0
    %261 = vmatprep.subr.bf16.mxu0 0
    %262 = vmatpush1.bf16.msra.mxu0 0
    %263 = vmatprep.subr.bf16.mxu0 0
    %264 = vmatpush1.bf16.msra.mxu0 0
    %265 = vmatprep.subr.bf16.mxu0 0
    %266 = vmatpush1.bf16.msra.mxu0 0
    %267 = vmatprep.mubr.bf16.mxu0 0
    %268 = vmatmul.mubr.bf16.gmra.mrb[0].mxu0 %v163
    %v269 = vpop.f32.mrb[0].mxu0
    %v270 = vadd.f32 %v185, %v269
    %v271 = vpop.f32.mrb[0].mxu0
    %v272 = vpop.f32.mrb[0].mxu0
    %v273 = vpop.f32.mrb[0].mxu0
    %274 = vdwg.mxu0
    %275 = vst [vmem:[#allocation7] sm:$0xff] %v270
    // Predicated region
    $region30: #{neural_net_forward.1} parent=1 // pred_check
      _
    $region31: #{neural_net_forward.1} parent=1 // pred_check_branch
      %277 = sbr.rel (0) target = $region33
    $region32: #{neural_net_forward.1} parent=1 // pred_region
      %s279 = ssub.s32 128, 128
      %280 = vsyncadd [#allocation4], %s279
      %s282 = sshll.u32 [#allocation7], 4
      %s283 = int_to_ptr.vmem [resolvable:$true] %s282
      %285 = dma.vmem_to_hbm [thread:$0]  %s283, 128, %s5, [#allocation4]
    $region33: #{neural_net_forward.1} parent=1 // pred_fallthru
      _
    // Predicated region
    $region34: #{neural_net_forward.1} parent=1 // pred_check
      _
    $region35: #{neural_net_forward.1} parent=1 // pred_check_branch
      %287 = sbr.rel (0) target = $region37
    $region36: #{neural_net_forward.1} parent=1 // pred_region
      %288 = dma.done [#allocation4], 128
    $region37: #{neural_net_forward.1} parent=1 // pred_fallthru
      _
    %289 = vsyncpa [#allocation3], 1
    %290 = vsyncpa [#allocation6], 1
    %291 = vsyncpa [#allocation4], 1

</llo_original>
